<compile_context>
chip_gen: v5e
topology: v5e:2x2
jax: 0.10.0
libtpu: 0.0.40
codegen_flags: <defaults>
</compile_context>

<pallas_src>
import functools

import jax
import jax.numpy as jnp
from jax.experimental import pallas as pl
from jax.experimental.pallas import tpu as pltpu

EPS = 1e-6
_LANES = 128


def _cdiv(a, b):
    return -(-a // b)


def _round_up(a, b):
    return _cdiv(a, b) * b


def _regdice2_kernel(x_ref, y_ref, tp_out_ref, oth_out_ref, tp_acc, oth_acc, *,
                     row_block, n_chunks, tile_cols, tiles_per_par, n_cols,
                     need_col_mask, use_identity, unroll):
    k = pl.program_id(2)                     # spatial reduction axis (innermost)

    @pl.when(k == 0)
    def _():
        tp_acc[...] = jnp.zeros_like(tp_acc)
        oth_acc[...] = jnp.zeros_like(oth_acc)

    if need_col_mask:
        # Global column of lane 0 / chunk 0 for this grid step.  Phantom steps
        # (their tile starts at or beyond n_cols) are fully masked to zero; the
        # index_map clamps their DMA onto the last real tile.
        base_col = (pl.program_id(1) * tiles_per_par + k) * tile_cols
        lane_iota = jax.lax.broadcasted_iota(jnp.int32, (row_block, _LANES), 1)

    def chunk(j, carry):
        tp_c, oth_c = carry
        c = pl.multiple_of(j * _LANES, _LANES)
        x = x_ref[:, pl.ds(c, _LANES)].astype(jnp.float32)
        y = y_ref[:, pl.ds(c, _LANES)].astype(jnp.float32)
        if need_col_mask:
            valid = (lane_iota + (base_col + c)) < n_cols
            x = jnp.where(valid, x, 0.0)
            y = jnp.where(valid, y, 0.0)
        d = 1.0 - y
        inv = pl.reciprocal(d, approx=True)
        inv = inv * (2.0 - d * inv)          # one Newton step -> ~exact 1/(1-y)
        if use_identity:
            # For y in [0, 1):  tp_elem = where(x<y, x, y*(1-x)/(1-y)) and
            # fp_elem + fn_elem == y - tp_elem, so accumulating tp and y is
            # sufficient (fewer VALU ops, one fewer accumulator).
            tpe = jnp.where(x < y, x, y * (1.0 - x) * inv)
            oth = y
        else:
            # Literal reference formulation (exact for arbitrary x, y).
            ratio = (x - y) * inv
            tpe = jnp.where(x < y, x, y - y * ratio)
            oth = jnp.maximum(ratio * y, 0.0) + jnp.maximum(y - x, 0.0)
        return tp_c + tpe, oth_c + oth

    zero = jnp.zeros((row_block, _LANES), jnp.float32)
    tp_c, oth_c = jax.lax.fori_loop(0, n_chunks, chunk, (zero, zero),
                                    unroll=unroll)
    tp_acc[...] += tp_c
    oth_acc[...] += oth_c

    @pl.when(k == pl.num_programs(2) - 1)
    def _():
        tp_out_ref[...] = tp_acc[...].sum(axis=-1, keepdims=True)
        oth_out_ref[...] = oth_acc[...].sum(axis=-1, keepdims=True)


def _default_vmem_budget():
    """Target bytes for the 2 inputs x 2 pipeline buffers (chip aware)."""
    cap = 64 * 1024 * 1024                   # conservative (v7x-sized) fallback
    try:
        cap = int(getattr(pltpu.get_tpu_info(), "vmem_capacity_bytes", cap))
    except Exception:
        pass
    return min(48 * 1024 * 1024, max(8 * 1024 * 1024, cap // 2))


def regdice2(x, y, *, max_row_block=32, max_spatial_tile=65536,
             vmem_budget_bytes=None, use_identity=True):
    """RegDice2 forward.  x, y: (B, C, *spatial) with identical shape/dtype.

    use_identity=True assumes the regression target y lies in [0, 1) (the
    intended domain of this loss) and exploits tp + fp + fn == y elementwise;
    set use_identity=False for the literal reference formulation (any y).
    Returns a float32 scalar.
    """
    assert x.shape == y.shape
    assert x.dtype == y.dtype
    assert len(x.shape) >= 2
    B, C = x.shape[0], x.shape[1]
    S = 1
    for d in x.shape[2:]:
        S *= int(d)
    n_rows = B * C

    # Row-major flatten of the spatial dims: free view, no copy, no dtype cast.
    x2 = jnp.reshape(x, (n_rows, S))
    y2 = jnp.reshape(y, (n_rows, S))

    itemsize = jnp.dtype(x.dtype).itemsize
    sublane = max(8, 32 // itemsize)         # 8 for f32, 16 for bf16

    if vmem_budget_bytes is None:
        vmem_budget_bytes = _default_vmem_budget()

    # ---- row blocking ------------------------------------------------------
    # Keep row_block <= 64 (vreg-resident carries), prefer >= 2 row blocks so
    # the "parallel" row axis can feed both v7x TensorCores, and raise the row
    # grain when the spatial extent alone cannot reach ~2 MiB per step.
    cap_rb = max(sublane, min(_round_up(max_row_block, sublane), 64))
    cols_est = min(_round_up(S, _LANES), _round_up(max_spatial_tile, _LANES))
    if 2 * cap_rb * cols_est * itemsize < 2 * 1024 * 1024:
        cap_rb = max(cap_rb, 64)
    if n_rows >= 2 * sublane:
        row_block = min(cap_rb, _round_up(_cdiv(n_rows, 2), sublane))
    else:
        row_block = min(cap_rb, _round_up(n_rows, sublane))
    num_row_blocks = _cdiv(n_rows, row_block)
    rows_out = num_row_blocks * row_block

    # ---- spatial tiling ------------------------------------------------------
    # If the rows give only one block, split the spatial reduction into two
    # independent "parallel" halves (partial sums combined in JAX) so the
    # second v7x core has work.  ts = largest 128-multiple keeping the
    # 2 inputs x 2 pipeline buffers inside the VMEM budget.
    desired_par = 2 if num_row_blocks == 1 else 1
    ts_budget = max(_LANES,
                    (vmem_budget_bytes // (4 * row_block * itemsize))
                    // _LANES * _LANES)
    ts = max(_LANES, min(ts_budget,
                         _round_up(_cdiv(S, desired_par), _LANES),
                         _round_up(max_spatial_tile, _LANES)))
    total_s_tiles = _cdiv(S, ts)
    num_par = min(desired_par, total_s_tiles)
    tiles_per_par = _cdiv(total_s_tiles, num_par)

    need_col_mask = (num_par * tiles_per_par * ts != S)
    n_chunks = ts // _LANES
    unroll = min(n_chunks, 8 if row_block <= 32 else 4)

    kernel = functools.partial(
        _regdice2_kernel, row_block=row_block, n_chunks=n_chunks, tile_cols=ts,
        tiles_per_par=tiles_per_par, n_cols=S, need_col_mask=need_col_mask,
        use_identity=use_identity, unroll=unroll)

    def in_map(i, p, k):
        # Clamp phantom tiles (only exist when the par split is ragged) onto
        # the last real tile; the in-kernel column mask zeroes their values.
        t = p * tiles_per_par + k
        return (i, jnp.minimum(t, total_s_tiles - 1))

    def out_map(i, p, k):
        return (p * num_row_blocks + i, 0)

    # Derive the compiler VMEM limit from the actual footprint (+ slack): a
    # caller-supplied budget can never silently exceed the limit, and the
    # default stays well under v7x's 64 MiB physical VMEM.
    footprint = (4 * row_block * ts * itemsize            # 2 inputs x 2 buffers
                 + 2 * row_block * _LANES * 4             # carry accumulators
                 + 2 * 2 * row_block * 4)                 # 2 outputs x 2 buffers
    vmem_limit = max(16 * 1024 * 1024, footprint + 4 * 1024 * 1024)

    out_rows = num_par * rows_out
    tp_sum, oth_sum = pl.pallas_call(
        kernel,
        out_shape=(jax.ShapeDtypeStruct((out_rows, 1), jnp.float32),
                   jax.ShapeDtypeStruct((out_rows, 1), jnp.float32)),
        grid_spec=pltpu.PrefetchScalarGridSpec(
            num_scalar_prefetch=0,
            grid=(num_row_blocks, num_par, tiles_per_par),
            in_specs=[pl.BlockSpec((row_block, ts), in_map),
                      pl.BlockSpec((row_block, ts), in_map)],
            out_specs=[pl.BlockSpec((row_block, 1), out_map),
                       pl.BlockSpec((row_block, 1), out_map)],
            scratch_shapes=[pltpu.VMEM((row_block, _LANES), jnp.float32),
                            pltpu.VMEM((row_block, _LANES), jnp.float32)],
        ),
        compiler_params=pltpu.CompilerParams(
            dimension_semantics=("parallel", "parallel", "arbitrary"),
            vmem_limit_bytes=int(vmem_limit),
        ),
    )(x2, y2)

    # Combine the tiny per-split partial sums and take the masked row mean.
    tp = tp_sum.reshape(num_par, rows_out)[:, :n_rows].sum(axis=0)
    oth = oth_sum.reshape(num_par, rows_out)[:, :n_rows].sum(axis=0)
    if use_identity:
        denom = tp + oth + EPS          # == 2*tp + (fp+fn) + eps since fp+fn = sum(y) - tp
    else:
        denom = 2.0 * tp + oth + EPS
    return jnp.mean(-(2.0 * tp + EPS) / denom)


def regdice2_ref(x, y):
    """Pure-JAX reference mirroring the PyTorch module (computed in f32)."""
    x = x.astype(jnp.float32)
    y = y.astype(jnp.float32)
    axes = tuple(range(2, x.ndim))
    tp = jnp.where(x < y, x, y - y * (x - y) / (1.0 - y)).sum(axes)
    fp = jax.nn.relu((x - y) / (1.0 - y) * y).sum(axes)
    fn = jax.nn.relu(y - x).sum(axes)
    return jnp.mean(-(2.0 * tp + EPS) / (2.0 * tp + fp + fn + EPS))


if __name__ == "__main__":
    key = jax.random.PRNGKey(0)
    cases = [
        # (shape, dtype, kwargs, tolerance)
        ((2, 4, 16, 16), jnp.float32, {}, 1e-4),                         # 1 row block, 2 par splits
        ((2, 4, 64, 64), jnp.float32, {"max_spatial_tile": 512}, 1e-4),  # multi-tile reduction
        ((2, 4, 18, 18), jnp.float32, {"max_spatial_tile": 128}, 1e-4),  # ragged cols + phantom tile
        ((2, 4, 18, 18), jnp.float32,
         {"max_spatial_tile": 128, "use_identity": False}, 1e-4),        # exact 3-term path
        ((5, 4, 16, 16), jnp.float32, {}, 1e-4),                         # 2 row blocks, ragged rows
        ((2, 4, 8, 8, 8), jnp.float32, {}, 1e-4),                        # 3-D spatial dims
        ((3, 4, 20, 20), jnp.bfloat16, {}, 2e-3),                        # bf16 inputs
    ]
    for idx, (shape, dtype, kw, tol) in enumerate(cases):
        kx, ky = jax.random.split(jax.random.fold_in(key, idx))
        # Regression predictions/targets in (0, 1) so that (1 - y) != 0.
        x = jax.random.uniform(kx, shape, jnp.float32,
                               minval=0.05, maxval=0.95).astype(dtype)
        y = jax.random.uniform(ky, shape, jnp.float32,
                               minval=0.05, maxval=0.95).astype(dtype)

        loss = jax.block_until_ready(regdice2(x, y, **kw))
        ref = jax.block_until_ready(regdice2_ref(x, y))

        assert jnp.isfinite(loss), (shape, float(loss))
        assert abs(float(loss) - float(ref)) < tol, \
            (shape, str(dtype), float(loss), float(ref), tol)
    print("KERNEL_OK")
</pallas_src>

<mosaic_0001>
module attributes {stable_mosaic.version = 11 : i64} {
  func.func @_regdice2_kernel(%arg0: i32, %arg1: i32, %arg2: i32, %arg3: memref<8x128xf32, #tpu.memory_space<vmem>>, %arg4: memref<8x128xf32, #tpu.memory_space<vmem>>, %arg5: memref<8x1xf32, #tpu.memory_space<vmem>>, %arg6: memref<8x1xf32, #tpu.memory_space<vmem>>, %arg7: memref<8x128xf32, #tpu.memory_space<vmem>>, %arg8: memref<8x128xf32, #tpu.memory_space<vmem>>) attributes {dimension_semantics = [#tpu.dimension_semantics<parallel>, #tpu.dimension_semantics<parallel>, #tpu.dimension_semantics<arbitrary>], iteration_bounds = array<i64: 1, 2, 1>, scalar_prefetch = 0 : i64, scratch_operands = 2 : i64, tpu.core_type = #tpu.core_type<tc>, window_params = [{transform_indices = @transform_0, window_bounds = array<i64: 8, 128>}, {transform_indices = @transform_1, window_bounds = array<i64: 8, 128>}, {transform_indices = @transform_2, window_bounds = array<i64: 8, 1>}, {transform_indices = @transform_3, window_bounds = array<i64: 8, 1>}]} {
    %c0_i32 = arith.constant 0 : i32
    %0 = arith.cmpi eq, %arg2, %c0_i32 : i32
    %1 = arith.extui %0 : i1 to i32
    %c0_i32_0 = arith.constant 0 : i32
    %2 = arith.cmpi ne, %1, %c0_i32_0 : i32
    scf.if %2 {
      %cst_16 = arith.constant 0.000000e+00 : f32
      %34 = vector.broadcast %cst_16 : f32 to vector<8x128xf32>
      %c0_17 = arith.constant 0 : index
      %c0_18 = arith.constant 0 : index
      %35 = vector.load %arg7[%c0_17, %c0_18] : memref<8x128xf32, #tpu.memory_space<vmem>>, vector<8x128xf32>
      tpu.vector_store %arg7[%c0_17, %c0_18], %34 {strides = array<i32>} : memref<8x128xf32, #tpu.memory_space<vmem>>, vector<8x128xf32>,
      %cst_19 = arith.constant 0.000000e+00 : f32
      %36 = vector.broadcast %cst_19 : f32 to vector<8x128xf32>
      %c0_20 = arith.constant 0 : index
      %c0_21 = arith.constant 0 : index
      %37 = vector.load %arg8[%c0_20, %c0_21] : memref<8x128xf32, #tpu.memory_space<vmem>>, vector<8x128xf32>
      tpu.vector_store %arg8[%c0_20, %c0_21], %36 {strides = array<i32>} : memref<8x128xf32, #tpu.memory_space<vmem>>, vector<8x128xf32>,
    } else {
    }
    %cst = arith.constant 0.000000e+00 : f32
    %3 = vector.broadcast %cst : f32 to vector<8x128xf32>
    %c0_i32_1 = arith.constant 0 : i32
    %c128_i32 = arith.constant 128 : i32
    %4 = arith.muli %c0_i32_1, %c128_i32 : i32
    %5 = tpu.assume_multiple %4, 128 : i32
    %c0 = arith.constant 0 : index
    %6 = arith.index_cast %5 : i32 to index
    %7 = vector.load %arg3[%c0, %6] : memref<8x128xf32, #tpu.memory_space<vmem>>, vector<8x128xf32>
    %c0_2 = arith.constant 0 : index
    %8 = arith.index_cast %5 : i32 to index
    %9 = vector.load %arg4[%c0_2, %8] : memref<8x128xf32, #tpu.memory_space<vmem>>, vector<8x128xf32>
    %cst_3 = arith.constant 1.000000e+00 : f32
    %10 = vector.broadcast %cst_3 : f32 to vector<8x128xf32>
    %11 = arith.subf %10, %9 : vector<8x128xf32>
    %12 = tpu.reciprocal %11 {approx = true} : vector<8x128xf32> -> vector<8x128xf32>
    %13 = arith.mulf %11, %12 : vector<8x128xf32>
    %cst_4 = arith.constant 2.000000e+00 : f32
    %14 = vector.broadcast %cst_4 : f32 to vector<8x128xf32>
    %15 = arith.subf %14, %13 : vector<8x128xf32>
    %16 = arith.mulf %12, %15 : vector<8x128xf32>
    %17 = arith.cmpf olt, %7, %9 : vector<8x128xf32>
    %cst_5 = arith.constant 1.000000e+00 : f32
    %18 = vector.broadcast %cst_5 : f32 to vector<8x128xf32>
    %19 = arith.subf %18, %7 : vector<8x128xf32>
    %20 = arith.mulf %9, %19 : vector<8x128xf32>
    %21 = arith.mulf %20, %16 : vector<8x128xf32>
    %22 = arith.select %17, %7, %21 : vector<8x128xi1>, vector<8x128xf32>
    %23 = arith.addf %3, %22 : vector<8x128xf32>
    %24 = arith.addf %3, %9 : vector<8x128xf32>
    %c1_i32 = arith.constant 1 : i32
    %c0_6 = arith.constant 0 : index
    %c0_7 = arith.constant 0 : index
    %25 = vector.load %arg7[%c0_6, %c0_7] : memref<8x128xf32, #tpu.memory_space<vmem>>, vector<8x128xf32>
    %26 = arith.addf %25, %23 : vector<8x128xf32>
    %c0_8 = arith.constant 0 : index
    %c0_9 = arith.constant 0 : index
    %27 = vector.load %arg7[%c0_8, %c0_9] : memref<8x128xf32, #tpu.memory_space<vmem>>, vector<8x128xf32>
    tpu.vector_store %arg7[%c0_8, %c0_9], %26 {strides = array<i32>} : memref<8x128xf32, #tpu.memory_space<vmem>>, vector<8x128xf32>,
    %c0_10 = arith.constant 0 : index
    %c0_11 = arith.constant 0 : index
    %28 = vector.load %arg8[%c0_10, %c0_11] : memref<8x128xf32, #tpu.memory_space<vmem>>, vector<8x128xf32>
    %29 = arith.addf %28, %24 : vector<8x128xf32>
    %c0_12 = arith.constant 0 : index
    %c0_13 = arith.constant 0 : index
    %30 = vector.load %arg8[%c0_12, %c0_13] : memref<8x128xf32, #tpu.memory_space<vmem>>, vector<8x128xf32>
    tpu.vector_store %arg8[%c0_12, %c0_13], %29 {strides = array<i32>} : memref<8x128xf32, #tpu.memory_space<vmem>>, vector<8x128xf32>,
    %c0_i32_14 = arith.constant 0 : i32
    %31 = arith.cmpi eq, %arg2, %c0_i32_14 : i32
    %32 = arith.extui %31 : i1 to i32
    %c0_i32_15 = arith.constant 0 : i32
    %33 = arith.cmpi ne, %32, %c0_i32_15 : i32
    scf.if %33 {
      %c0_16 = arith.constant 0 : index
      %c0_17 = arith.constant 0 : index
      %34 = vector.load %arg7[%c0_16, %c0_17] : memref<8x128xf32, #tpu.memory_space<vmem>>, vector<8x128xf32>
      %cst_18 = arith.constant dense<0.000000e+00> : vector<8xf32>
      %35 = vector.multi_reduction <add>, %34, %cst_18 [1] : vector<8x128xf32> to vector<8xf32>
      %36 = vector.shape_cast %35 : vector<8xf32> to vector<8x1xf32>
      %c0_19 = arith.constant 0 : index
      %c0_20 = arith.constant 0 : index
      %37 = vector.load %arg5[%c0_19, %c0_20] : memref<8x1xf32, #tpu.memory_space<vmem>>, vector<8x1xf32>
      tpu.vector_store %arg5[%c0_19, %c0_20], %36 {strides = array<i32>} : memref<8x1xf32, #tpu.memory_space<vmem>>, vector<8x1xf32>,
      %c0_21 = arith.constant 0 : index
      %c0_22 = arith.constant 0 : index
      %38 = vector.load %arg8[%c0_21, %c0_22] : memref<8x128xf32, #tpu.memory_space<vmem>>, vector<8x128xf32>
      %cst_23 = arith.constant dense<0.000000e+00> : vector<8xf32>
      %39 = vector.multi_reduction <add>, %38, %cst_23 [1] : vector<8x128xf32> to vector<8xf32>
      %40 = vector.shape_cast %39 : vector<8xf32> to vector<8x1xf32>
      %c0_24 = arith.constant 0 : index
      %c0_25 = arith.constant 0 : index
      %41 = vector.load %arg6[%c0_24, %c0_25] : memref<8x1xf32, #tpu.memory_space<vmem>>, vector<8x1xf32>
      tpu.vector_store %arg6[%c0_24, %c0_25], %40 {strides = array<i32>} : memref<8x1xf32, #tpu.memory_space<vmem>>, vector<8x1xf32>,
    } else {
    }
    return
  }
  func.func @transform_0(%arg0: i32, %arg1: i32, %arg2: i32) -> (i32, i32) {
    %c1_i32 = arith.constant 1 : i32
    %0 = arith.muli %arg1, %c1_i32 : i32
    %1 = arith.addi %0, %arg2 : i32
    %c1_i32_0 = arith.constant 1 : i32
    %2 = arith.minsi %1, %c1_i32_0 : i32
    %c0_i32 = arith.constant 0 : i32
    return %arg0, %2 : i32, i32
  }
  func.func @transform_1(%arg0: i32, %arg1: i32, %arg2: i32) -> (i32, i32) {
    %c1_i32 = arith.constant 1 : i32
    %0 = arith.muli %arg1, %c1_i32 : i32
    %1 = arith.addi %0, %arg2 : i32
    %c1_i32_0 = arith.constant 1 : i32
    %2 = arith.minsi %1, %c1_i32_0 : i32
    %c0_i32 = arith.constant 0 : i32
    return %arg0, %2 : i32, i32
  }
  func.func @transform_2(%arg0: i32, %arg1: i32, %arg2: i32) -> (i32, i32) {
    %c1_i32 = arith.constant 1 : i32
    %0 = arith.muli %arg1, %c1_i32 : i32
    %1 = arith.addi %0, %arg0 : i32
    %c0_i32 = arith.constant 0 : i32
    %c0_i32_0 = arith.constant 0 : i32
    return %1, %c0_i32 : i32, i32
  }
  func.func @transform_3(%arg0: i32, %arg1: i32, %arg2: i32) -> (i32, i32) {
    %c1_i32 = arith.constant 1 : i32
    %0 = arith.muli %arg1, %c1_i32 : i32
    %1 = arith.addi %0, %arg0 : i32
    %c0_i32 = arith.constant 0 : i32
    %c0_i32_0 = arith.constant 0 : i32
    return %1, %c0_i32 : i32, i32
  }
}

</mosaic_0001>

<llo_original>
// kernel: tpu_custom_call.1
$region0: #{tpu_custom_call.1}
  #allocation0 [shape = 'u32[]', space=smem, size = 0x4, offset = 0x4, fixed_abs, tag = 'smem constant byte address 0x4 - core index']
  #allocation1 [shape = 'u32[72,128]{1,0:T(1,128)}', space=vmem, size = 0x9000, scoped, tag = 'internal scratch']
  #allocation2 [shape = 'f32[8,128]{1,0:T(8,128)}', space=vmem, size = 0x1000, scoped, tag = 'scratch operand']
  #allocation3 [shape = 'f32[8,128]{1,0:T(8,128)}', space=vmem, size = 0x1000, scoped, tag = 'scratch operand']
  %s0 = inlined_call_operand.hbm [shape: f32[8,256], index: 0, kind: input, shape index: {}]
  %s1 = inlined_call_operand.hbm [shape: f32[8,256], index: 1, kind: input, shape index: {}]
  %s2 = inlined_call_operand.vmem [shape: f32[16,1], index: 2, kind: output, shape index: {0}]
  %s3 = inlined_call_operand.vmem [shape: f32[16,1], index: 3, kind: output, shape index: {1}]
  %4 = xla_tuple %s2, %s3
  %s5 = sld [smem:[#allocation0]]
  $region65: #{tpu_custom_call.1} parent=0
    _
  %s7 = ssub.s32 1, %s5
  %s8 = scalar_select 0, %s7, %s5
  $region1: #{tpu_custom_call.1} parent=0
    #allocation4 [shape = 'u8[8192]{0}', space=vmem, size = 0x2000, scoped, tag = 'input window, operand 0']
    #allocation5 [shape = 's32[2]{0}', space=sflag, size = 0x8, scoped, tag = 'scoped memory for tpu_custom_call.1']
    #allocation6 [shape = 'u8[8192]{0}', space=vmem, size = 0x2000, scoped, tag = 'input window, operand 1']
    #allocation7 [shape = 's32[2]{0}', space=sflag, size = 0x8, scoped, tag = 'scoped memory for tpu_custom_call.1']
    %9 = vsyncpa [#allocation5], 0
    %s10 = scalar_lea.sflag [#allocation5], 1
    %11 = vsyncpa %s10, 0
    %12 = vsyncpa [#allocation7], 0
    %s13 = scalar_lea.sflag [#allocation7], 1
    %14 = vsyncpa %s13, 0
    loop: start=0, step=1, limit=4
    $region2: #{tpu_custom_call.1} parent=1 // loop_pre_header
      _
    $region3: #{tpu_custom_call.1} parent=1 // loop_header
      %s16 = sphi 0, %s20
      %p17 = scmp.ge.s32.totalorder %s16, 4
      %s23 = sphi 0, %s42
      %s24 = sphi 0, %s38
      %s25 = sphi 0, %s34
      %s26 = sphi 0, %s23
      %s27 = sphi 0, %s24
      %s28 = sphi 0, %s25
      %s29 = sphi 0, %s26
      %s30 = sphi 0, %s27
      %s31 = sphi 0, %s28
      %s53 = sphi 0, %s55
      %s56 = sphi 0, %s53
      %s57 = sphi 0, %s56
      %s73 = sphi 0, %s57
      %s87 = sphi 0, %s89
      %s90 = sphi 0, %s87
      %s91 = sphi 0, %s90
      %s107 = sphi 0, %s91
      %s115 = sphi 0, %s117
      %s118 = sphi 0, %s115
      %s119 = sphi 0, %s118
      %s135 = sphi 0, %s119
      %s143 = sphi 0, %s145
      %s146 = sphi 0, %s143
      %s147 = sphi 0, %s146
      %s163 = sphi 0, %s147
    $region4: #{tpu_custom_call.1} parent=1 // loop_header_branch
      %19 = sbr.rel (%p17) target = $region8
    $region5: #{tpu_custom_call.1} parent=1 // loop_body
      %s21 = ssub.s32 %s16, 1
      %s22 = ssub.s32 %s16, 2
      %s32 = sadd.s32 1, %s25
      %p33 = scmp.ge.s32.totalorder %s32, 1
      %s34 = scalar_select %p33, 0, %s32
      %s35 = sadd.s32 1, %s24
      %s36 = scalar_select %p33, %s35, %s24
      %p37 = scmp.ge.s32.totalorder %s36, 2
      %s38 = scalar_select %p37, 0, %s36
      %s39 = sadd.s32 1, %s23
      %s40 = scalar_select %p37, %s39, %s23
      %p41 = scmp.ge.s32.totalorder %s40, 1
      %s42 = scalar_select %p41, 0, %s40
      %s43 = sadd.s32 %s24, %s25
      %p44 = scmp.lt.s32.totalorder %s43, 1
      %s45 = scalar_select %p44, %s43, 1
      %s46 = sadd.s32 %s38, %s34
      %p47 = scmp.lt.s32.totalorder %s46, 1
      %s48 = scalar_select %p47, %s46, 1
      %s49 = ssub.s32 %s23, %s42
      %s50 = ssub.s32 %s45, %s48
      %s51 = sor.u32 %s49, %s50
      %p52 = scmp.eq.s32.totalorder %s51, 0
      %s54 = sadd.s32 %s53, 1
      %s55 = scalar_select %p52, %s53, %s54
      %p58 = pneg %p52
      %p59 = scmp.eq.s32.totalorder %s16, 1
      %p60 = por %p58, %p59
      %p61 = scmp.ne.s32.totalorder %s53, %s56
      %p62 = scmp.eq.s32.totalorder %s16, 0
      %p63 = por %p61, %p62
      %p64 = scmp.ne.s32.totalorder %s53, %s56
      %p65 = scmp.eq.s32.totalorder %s21, 1
      %p66 = por %p64, %p65
      %p67 = scmp.ne.s32.totalorder %s56, %s57
      %p68 = scmp.eq.s32.totalorder %s21, 0
      %p69 = por %p67, %p68
      %p70 = scmp.ne.s32.totalorder %s56, %s57
      %p71 = scmp.eq.s32.totalorder %s22, 1
      %p72 = por %p70, %p71
      %p74 = scmp.ne.s32.totalorder %s57, %s73
      %p75 = scmp.eq.s32.totalorder %s22, 0
      %p76 = por %p74, %p75
      %s77 = sadd.s32 %s24, %s25
      %p78 = scmp.lt.s32.totalorder %s77, 1
      %s79 = scalar_select %p78, %s77, 1
      %s80 = sadd.s32 %s38, %s34
      %p81 = scmp.lt.s32.totalorder %s80, 1
      %s82 = scalar_select %p81, %s80, 1
      %s83 = ssub.s32 %s23, %s42
      %s84 = ssub.s32 %s79, %s82
      %s85 = sor.u32 %s83, %s84
      %p86 = scmp.eq.s32.totalorder %s85, 0
      %s88 = sadd.s32 %s87, 1
      %s89 = scalar_select %p86, %s87, %s88
      %p92 = pneg %p86
      %p93 = scmp.eq.s32.totalorder %s16, 1
      %p94 = por %p92, %p93
      %p95 = scmp.ne.s32.totalorder %s87, %s90
      %p96 = scmp.eq.s32.totalorder %s16, 0
      %p97 = por %p95, %p96
      %p98 = scmp.ne.s32.totalorder %s87, %s90
      %p99 = scmp.eq.s32.totalorder %s21, 1
      %p100 = por %p98, %p99
      %p101 = scmp.ne.s32.totalorder %s90, %s91
      %p102 = scmp.eq.s32.totalorder %s21, 0
      %p103 = por %p101, %p102
      %p104 = scmp.ne.s32.totalorder %s90, %s91
      %p105 = scmp.eq.s32.totalorder %s22, 1
      %p106 = por %p104, %p105
      %p108 = scmp.ne.s32.totalorder %s91, %s107
      %p109 = scmp.eq.s32.totalorder %s22, 0
      %p110 = por %p108, %p109
      %s111 = sadd.s32 %s24, %s23
      %s112 = sadd.s32 %s38, %s42
      %s113 = ssub.s32 %s111, %s112
      %p114 = scmp.eq.s32.totalorder %s113, 0
      %s116 = sadd.s32 %s115, 1
      %s117 = scalar_select %p114, %s115, %s116
      %p120 = pneg %p114
      %p121 = scmp.eq.s32.totalorder %s16, 1
      %p122 = por %p120, %p121
      %p123 = scmp.ne.s32.totalorder %s115, %s118
      %p124 = scmp.eq.s32.totalorder %s16, 0
      %p125 = por %p123, %p124
      %p126 = scmp.ne.s32.totalorder %s115, %s118
      %p127 = scmp.eq.s32.totalorder %s21, 1
      %p128 = por %p126, %p127
      %p129 = scmp.ne.s32.totalorder %s118, %s119
      %p130 = scmp.eq.s32.totalorder %s21, 0
      %p131 = por %p129, %p130
      %p132 = scmp.ne.s32.totalorder %s118, %s119
      %p133 = scmp.eq.s32.totalorder %s22, 1
      %p134 = por %p132, %p133
      %p136 = scmp.ne.s32.totalorder %s119, %s135
      %p137 = scmp.eq.s32.totalorder %s22, 0
      %p138 = por %p136, %p137
      %s139 = sadd.s32 %s24, %s23
      %s140 = sadd.s32 %s38, %s42
      %s141 = ssub.s32 %s139, %s140
      %p142 = scmp.eq.s32.totalorder %s141, 0
      %s144 = sadd.s32 %s143, 1
      %s145 = scalar_select %p142, %s143, %s144
      %p148 = pneg %p142
      %p149 = scmp.eq.s32.totalorder %s16, 1
      %p150 = por %p148, %p149
      %p151 = scmp.ne.s32.totalorder %s143, %s146
      %p152 = scmp.eq.s32.totalorder %s16, 0
      %p153 = por %p151, %p152
      %p154 = scmp.ne.s32.totalorder %s143, %s146
      %p155 = scmp.eq.s32.totalorder %s21, 1
      %p156 = por %p154, %p155
      %p157 = scmp.ne.s32.totalorder %s146, %s147
      %p158 = scmp.eq.s32.totalorder %s21, 0
      %p159 = por %p157, %p158
      %p160 = scmp.ne.s32.totalorder %s146, %s147
      %p161 = scmp.eq.s32.totalorder %s22, 1
      %p162 = por %p160, %p161
      %p164 = scmp.ne.s32.totalorder %s147, %s163
      %p165 = scmp.eq.s32.totalorder %s22, 0
      %p166 = por %p164, %p165
      %p167 = scmp.le.s32.totalorder 1, %s16
      %p168 = scmp.lt.s32.totalorder %s16, 3
      %p169 = pnand %p167, %p168
      %p170 = pneg %p169
      // Predicated region
      $region9: #{tpu_custom_call.1} parent=5 // pred_check
        _
      $region10: #{tpu_custom_call.1} parent=5 // pred_check_branch
        %172 = sbr.rel (%p169) target = $region12
      $region11: #{tpu_custom_call.1} parent=5 // pred_region
        %s173 = ssub.s32 %s16, 1
      $region12: #{tpu_custom_call.1} parent=5 // pred_fallthru
        _
      %p174 = scmp.lt.s32.totalorder %s16, 2
      // Predicated region
      $region13: #{tpu_custom_call.1} parent=5 // pred_check
        %p175 = pneg %p174
      $region14: #{tpu_custom_call.1} parent=5 // pred_check_branch
        %177 = sbr.rel (%p175) target = $region16
      $region15: #{tpu_custom_call.1} parent=5 // pred_region
        // Predicated region
        $region17: #{tpu_custom_call.1} parent=15 // pred_check
          %p178 = pneg %p63
        $region18: #{tpu_custom_call.1} parent=15 // pred_check_branch
          %180 = sbr.rel (%p178) target = $region20
        $region19: #{tpu_custom_call.1} parent=15 // pred_region
          %s181 = sand.u32 %s53, 1
          %s182 = scalar_lea.sflag [#allocation5], %s181
          %s183 = sand.u32 %s53, 1
          %s184 = smul.addr %s183, 8
          %s185 = scalar_lea.vmem [#allocation4], %s184
          %s186 = sadd.s32 %s24, %s25
          %p187 = scmp.lt.s32.totalorder %s186, 1
          %s188 = scalar_select %p187, %s186, 1
          %190 = vsyncadd %s182, 0
          %s191 = smul.addr %s23, 2
          %s192 = sadd.s32 %s188, %s191
          %s193 = smul.addr %s192, 8
          %s194 = scalar_lea.hbm %s0, %s193
          %s196 = sshll.u32 %s194, 4
          %s197 = int_to_ptr.hbm [resolvable:$true] %s196
          %s198 = sshll.u32 %s185, 4
          %s199 = int_to_ptr.vmem [resolvable:$true] %s198
          %201 = dma.hbm_to_vmem [thread:$0]  %s197, 128, %s199, %s182
        $region20: #{tpu_custom_call.1} parent=15 // pred_fallthru
          _
        // Predicated region
        $region21: #{tpu_custom_call.1} parent=15 // pred_check
          %p202 = pneg %p97
        $region22: #{tpu_custom_call.1} parent=15 // pred_check_branch
          %204 = sbr.rel (%p202) target = $region24
        $region23: #{tpu_custom_call.1} parent=15 // pred_region
          %s205 = sand.u32 %s87, 1
          %s206 = scalar_lea.sflag [#allocation7], %s205
          %s207 = sand.u32 %s87, 1
          %s208 = smul.addr %s207, 8
          %s209 = scalar_lea.vmem [#allocation6], %s208
          %s210 = sadd.s32 %s24, %s25
          %p211 = scmp.lt.s32.totalorder %s210, 1
          %s212 = scalar_select %p211, %s210, 1
          %214 = vsyncadd %s206, 0
          %s215 = smul.addr %s23, 2
          %s216 = sadd.s32 %s212, %s215
          %s217 = smul.addr %s216, 8
          %s218 = scalar_lea.hbm %s1, %s217
          %s220 = sshll.u32 %s218, 4
          %s221 = int_to_ptr.hbm [resolvable:$true] %s220
          %s222 = sshll.u32 %s209, 4
          %s223 = int_to_ptr.vmem [resolvable:$true] %s222
          %225 = dma.hbm_to_vmem [thread:$0]  %s221, 128, %s223, %s206
        $region24: #{tpu_custom_call.1} parent=15 // pred_fallthru
          _
      $region16: #{tpu_custom_call.1} parent=5 // pred_fallthru
        _
      %p226 = scmp.le.s32.totalorder 1, %s16
      %p227 = scmp.lt.s32.totalorder %s16, 3
      %p228 = pnand %p226, %p227
      %p229 = pneg %p228
      // Predicated region
      $region25: #{tpu_custom_call.1} parent=5 // pred_check
        _
      $region26: #{tpu_custom_call.1} parent=5 // pred_check_branch
        %231 = sbr.rel (%p228) target = $region28
      $region27: #{tpu_custom_call.1} parent=5 // pred_region
        %s232 = ssub.s32 %s16, 1
        %s233 = sand.u32 %s56, 1
        %s234 = scalar_lea.sflag [#allocation5], %s233
        %s235 = sand.u32 %s56, 1
        %s236 = smul.addr %s235, 8
        %s237 = scalar_lea.vmem [#allocation4], %s236
        // Predicated region
        $region29: #{tpu_custom_call.1} parent=27 // pred_check
          %p238 = pneg %p69
        $region30: #{tpu_custom_call.1} parent=27 // pred_check_branch
          %240 = sbr.rel (%p238) target = $region32
        $region31: #{tpu_custom_call.1} parent=27 // pred_region
          %242 = dma.done %s234, 128
        $region32: #{tpu_custom_call.1} parent=27 // pred_fallthru
          _
        %s243 = sand.u32 %s90, 1
        %s244 = scalar_lea.sflag [#allocation7], %s243
        %s245 = sand.u32 %s90, 1
        %s246 = smul.addr %s245, 8
        %s247 = scalar_lea.vmem [#allocation6], %s246
        // Predicated region
        $region33: #{tpu_custom_call.1} parent=27 // pred_check
          %p248 = pneg %p103
        $region34: #{tpu_custom_call.1} parent=27 // pred_check_branch
          %250 = sbr.rel (%p248) target = $region36
        $region35: #{tpu_custom_call.1} parent=27 // pred_region
          %252 = dma.done %s244, 128
        $region36: #{tpu_custom_call.1} parent=27 // pred_fallthru
          _
        %s253 = sand.u32 %s56, 1
        %s254 = scalar_lea.sflag [#allocation5], %s253
        %s255 = sand.u32 %s56, 1
        %s256 = smul.addr %s255, 8
        %s257 = scalar_lea.vmem [#allocation4], %s256
        %p258 = pneg %p69
        %p259 = pneg %p66
        %s260 = sand.u32 %s90, 1
        %s261 = scalar_lea.sflag [#allocation7], %s260
        %s262 = sand.u32 %s90, 1
        %s263 = smul.addr %s262, 8
        %s264 = scalar_lea.vmem [#allocation6], %s263
        %p265 = pneg %p103
        %p266 = pneg %p100
        %p267 = pneg %p131
        %p268 = pneg %p128
        %s269 = sadd.s32 %s27, %s26
        %p270 = scmp.lt.s32.totalorder %s269, 1
        %s271 = scalar_select %p270, %s269, 1
        %s272 = smul.addr %s271, 8
        %s273 = scalar_lea.vmem %s2, %s272
        %p274 = pneg %p159
        %p275 = pneg %p156
        %s276 = sadd.s32 %s27, %s26
        %p277 = scmp.lt.s32.totalorder %s276, 1
        %s278 = scalar_select %p277, %s276, 1
        %s279 = smul.addr %s278, 8
        %s280 = scalar_lea.vmem %s3, %s279
        %s281 = sadd.s32 %s27, %s28
        %p282 = scmp.lt.s32.totalorder %s281, 1
        %s283 = scalar_select %p282, %s281, 1
        %s284 = sadd.s32 %s27, %s28
        %p285 = scmp.lt.s32.totalorder %s284, 1
        %s286 = scalar_select %p285, %s284, 1
        %s287 = sadd.s32 %s27, %s26
        %p288 = scmp.lt.s32.totalorder %s287, 1
        %s289 = scalar_select %p288, %s287, 1
        %s290 = smul.addr %s289, 8
        %s291 = scalar_lea.vmem %s2, %s290
        %s292 = sadd.s32 %s27, %s26
        %s293 = sadd.s32 %s27, %s26
        %p294 = scmp.lt.s32.totalorder %s293, 1
        %s295 = scalar_select %p294, %s293, 1
        %s296 = smul.addr %s295, 8
        %s297 = scalar_lea.vmem %s3, %s296
        %s298 = sadd.s32 %s27, %s26
        %p299 = scmp.eq.s32.totalorder %s28, 0
        // Predicated region
        $region37: #{tpu_custom_call.1} parent=27 // pred_check
          %p300 = pneg %p299
        $region38: #{tpu_custom_call.1} parent=27 // pred_check_branch
          %302 = sbr.rel (%p300) target = $region40
        $region39: #{tpu_custom_call.1} parent=27 // pred_region
          %303 = vst [vmem:[#allocation2] sm:$0xff] 0.0
          %304 = vst [vmem:[#allocation3] sm:$0xff] 0.0
        $region40: #{tpu_custom_call.1} parent=27 // pred_fallthru
          _
        %v305 = vld [vmem:[%s237] sm:$0xff]
        %v306 = vld [vmem:[%s247] sm:$0xff]
        %v307 = vsub.f32 1.0, %v306
        %v308 = vrcp.pop %v307
        %v309 = vmul.f32 %v307, %v308
        %v310 = vsub.f32 2.0, %v309
        %v311 = vmul.f32 %v308, %v310
        %vm312 = vcmp.lt.f32.partialorder %v305, %v306
        %v313 = vsub.f32 1.0, %v305
        %v314 = vmul.f32 %v306, %v313
        %v315 = vmul.f32 %v314, %v311
        %v316 = vsel %vm312, %v305, %v315
        %v317 = vadd.f32 %v316, 0.0
        %v318 = vadd.f32 %v306, 0.0
        %v319 = vld [vmem:[#allocation2] sm:$0xff]
        %v320 = vadd.f32 %v319, %v317
        %321 = vst [vmem:[#allocation2] sm:$0xff] %v320
        %v322 = vld [vmem:[#allocation3] sm:$0xff]
        %v323 = vadd.f32 %v322, %v318
        %324 = vst [vmem:[#allocation3] sm:$0xff] %v323
        // Predicated region
        $region41: #{tpu_custom_call.1} parent=27 // pred_check
          %p325 = pneg %p299
        $region42: #{tpu_custom_call.1} parent=27 // pred_check_branch
          %327 = sbr.rel (%p325) target = $region44
        $region43: #{tpu_custom_call.1} parent=27 // pred_region
          %v328 = vld [vmem:[#allocation2] sm:$0xff]
          %329 = vadd.xlane.f32.xlu0 %v328
          %v330 = vpop.xlane.xlu0 %329
          %vm331 = vcmask 7168
          %332 = vst.msk [vmem:[%s291] sm:$0xff] %vm331, %v330
          %v333 = vld [vmem:[#allocation3] sm:$0xff]
          %334 = vadd.xlane.f32.xlu0 %v333
          %v335 = vpop.xlane.xlu0 %334
          %336 = vst.msk [vmem:[%s297] sm:$0xff] %vm331, %v335
        $region44: #{tpu_custom_call.1} parent=27 // pred_fallthru
          _
        %s337 = sadd.s32 %s27, %s26
        %p338 = scmp.lt.s32.totalorder %s337, 1
        %s339 = scalar_select %p338, %s337, 1
        %s340 = smul.addr %s339, 8
        %s341 = scalar_lea.vmem %s2, %s340
        %s342 = sadd.s32 %s27, %s26
        %p343 = scmp.lt.s32.totalorder %s342, 1
        %s344 = scalar_select %p343, %s342, 1
        %s345 = smul.addr %s344, 8
        %s346 = scalar_lea.vmem %s3, %s345
        // Predicated region
        $region45: #{tpu_custom_call.1} parent=27 // pred_check
          %p347 = pneg %p128
        $region46: #{tpu_custom_call.1} parent=27 // pred_check_branch
          %349 = sbr.rel (%p347) target = $region48
        $region47: #{tpu_custom_call.1} parent=27 // pred_region
          %s350 = sadd.s32 %s27, %s26
        $region48: #{tpu_custom_call.1} parent=27 // pred_fallthru
          _
        // Predicated region
        $region49: #{tpu_custom_call.1} parent=27 // pred_check
          %p351 = pneg %p156
        $region50: #{tpu_custom_call.1} parent=27 // pred_check_branch
          %353 = sbr.rel (%p351) target = $region52
        $region51: #{tpu_custom_call.1} parent=27 // pred_region
          %s354 = sadd.s32 %s27, %s26
        $region52: #{tpu_custom_call.1} parent=27 // pred_fallthru
          _
      $region28: #{tpu_custom_call.1} parent=5 // pred_fallthru
        _
      %p355 = scmp.le.s32.totalorder 2, %s16
      // Predicated region
      $region53: #{tpu_custom_call.1} parent=5 // pred_check
        %p356 = pneg %p355
      $region54: #{tpu_custom_call.1} parent=5 // pred_check_branch
        %358 = sbr.rel (%p356) target = $region56
      $region55: #{tpu_custom_call.1} parent=5 // pred_region
        %s359 = ssub.s32 %s16, 2
        // Predicated region
        $region57: #{tpu_custom_call.1} parent=55 // pred_check
          %p360 = pneg %p134
        $region58: #{tpu_custom_call.1} parent=55 // pred_check_branch
          %362 = sbr.rel (%p360) target = $region60
        $region59: #{tpu_custom_call.1} parent=55 // pred_region
          %s363 = sadd.s32 %s30, %s29
          %p364 = scmp.lt.s32.totalorder %s363, 1
          %s365 = scalar_select %p364, %s363, 1
          %s366 = smul.addr %s365, 8
          %s367 = scalar_lea.vmem %s2, %s366
        $region60: #{tpu_custom_call.1} parent=55 // pred_fallthru
          _
        // Predicated region
        $region61: #{tpu_custom_call.1} parent=55 // pred_check
          %p368 = pneg %p162
        $region62: #{tpu_custom_call.1} parent=55 // pred_check_branch
          %370 = sbr.rel (%p368) target = $region64
        $region63: #{tpu_custom_call.1} parent=55 // pred_region
          %s371 = sadd.s32 %s30, %s29
          %p372 = scmp.lt.s32.totalorder %s371, 1
          %s373 = scalar_select %p372, %s371, 1
          %s374 = smul.addr %s373, 8
          %s375 = scalar_lea.vmem %s3, %s374
        $region64: #{tpu_custom_call.1} parent=55 // pred_fallthru
          _
      $region56: #{tpu_custom_call.1} parent=5 // pred_fallthru
        _
    $region6: #{tpu_custom_call.1} parent=1 // loop_footer
      %s20 = sadd.s32 1, %s16
    $region7: #{tpu_custom_call.1} parent=1 // loop_footer_branch
      %15 = sbr.rel target = $region3
    $region8: #{tpu_custom_call.1} parent=1 // loop_exit
      _
    %376 = vsyncpa [#allocation5], 1
    %s377 = scalar_lea.sflag [#allocation5], 1
    %378 = vsyncpa %s377, 1
    %379 = vsyncpa [#allocation7], 1
    %s380 = scalar_lea.sflag [#allocation7], 1
    %381 = vsyncpa %s380, 1

</llo_original>
